<compile_context>
chip_gen: v6e
topology: v6e:2x2x1
jax: 0.10.0
libtpu: 0.0.40
codegen_flags: <defaults>
</compile_context>

<pallas_src>
import functools
import math

import jax
import jax.numpy as jnp
from jax import lax
from jax.experimental import pallas as pl
from jax.experimental.pallas import tpu as pltpu

# ----------------------------- config -------------------------------------
VOCAB = 100
MAX_POS = 16
TYPE_VOCAB = 2
HIDDEN = 32
NUM_HEADS = 2
HEAD_DIM = HIDDEN // NUM_HEADS
INTERMEDIATE = 64
NUM_LAYERS = 2
NUM_LABELS = 2
LN_EPS = 1e-12
LANE = 128          # TPU lane width: classifier output padded to this, sliced outside
MASK_NEG = -1e9     # additive mask for padded keys

# Head groups for the attention grid's second ("parallel") axis.  Group width
# (heads_per_group * HEAD_DIM) must be a multiple of 128 or equal HIDDEN to keep
# the output block lane-legal: 1 at this toy size; use 2/3/6 at real 12-head scale.
ATTN_HEAD_GROUPS = 1

# 44 MiB scoped-VMEM cap: comfortably under v7x's 64 MiB physical VMEM while far
# above the v5e 16 MiB default; at real scale pair with the 512-row tiles below.
VMEM_LIMIT = 44 * 1024 * 1024


def _cp(ndims):
    return pltpu.CompilerParams(
        dimension_semantics=("parallel",) * ndims,
        vmem_limit_bytes=VMEM_LIMIT,
    )


def _row_tile(m, target=512):
    """Largest multiple-of-8 divisor of m that is <= target; prefer >=2 grid
    steps so the row axis is actually pipelined / megacore-shardable."""
    if m % 8:
        return m
    cap = min(m, target)
    if cap == m and m > 8:
        cap = m // 2
    t = (cap // 8) * 8
    while t >= 8 and m % t:
        t -= 8
    return t if t >= 8 else m


def _inv_spec(block_shape):
    """BlockSpec for a grid-invariant operand (weights / biases / LN params):
    fetched once, single-buffered so VMEM is not wasted on a second copy."""
    index_map = lambda *args: (0,) * len(block_shape)
    try:
        return pl.BlockSpec(block_shape, index_map, pipeline_mode=pl.Buffered(1))
    except TypeError:  # older jax without pipeline_mode kwarg -> default buffering
        return pl.BlockSpec(block_shape, index_map)


# ----------------------------- kernels ------------------------------------


def _emb_ln_kernel(w_ref, p_ref, t_ref, g_ref, b_ref, o_ref):
    """LayerNorm(word + position + token_type) — embedding add fused with LN."""
    x = w_ref[...] + p_ref[...] + t_ref[...]                 # (1, ts, H) f32
    mu = jnp.mean(x, axis=-1, keepdims=True)
    var = jnp.mean((x - mu) * (x - mu), axis=-1, keepdims=True)
    inv = lax.rsqrt(var + LN_EPS)
    o_ref[...] = ((x - mu) * inv * g_ref[...] + b_ref[...]).astype(o_ref.dtype)


def pallas_emb_ln(word, pos, tok, gamma, beta):
    B, S, H = word.shape
    ts = _row_tile(S)
    return pl.pallas_call(
        _emb_ln_kernel,
        out_shape=jax.ShapeDtypeStruct((B, S, H), jnp.float32),
        grid=(B, S // ts),
        in_specs=[
            pl.BlockSpec((1, ts, H), lambda b, s: (b, s, 0)),
            pl.BlockSpec((1, ts, H), lambda b, s: (0, s, 0)),   # pos broadcast over batch
            pl.BlockSpec((1, ts, H), lambda b, s: (b, s, 0)),
            _inv_spec((1, 1, H)),
            _inv_spec((1, 1, H)),
        ],
        out_specs=pl.BlockSpec((1, ts, H), lambda b, s: (b, s, 0)),
        compiler_params=_cp(2),
    )(word, pos, tok, gamma.reshape(1, 1, H), beta.reshape(1, 1, H))


def _attn_kernel(x_ref, w_ref, b_ref, m_ref, o_ref, *,
                 heads_per_group, head_dim, group_dim):
    """One (batch, head-group) step: QKV projection + softmax(q k^T + mask) v.
    The QKV matmul lives in-kernel (no HBM round trip); each head's context is
    stored directly into its lane slab of the (S, group_dim) output block."""
    xb = x_ref[0].astype(jnp.bfloat16)                        # (S, H)
    qkv = jnp.dot(xb, w_ref[0],
                  preferred_element_type=jnp.float32) + b_ref[0]   # (S, 3*gd) f32
    mask = m_ref[0]                                           # (1, S) additive f32
    for h in range(heads_per_group):
        lo = h * head_dim
        q = qkv[:, lo:lo + head_dim].astype(jnp.bfloat16)
        k = qkv[:, group_dim + lo:group_dim + lo + head_dim].astype(jnp.bfloat16)
        v = qkv[:, 2 * group_dim + lo:2 * group_dim + lo + head_dim].astype(jnp.bfloat16)
        # 1/sqrt(head_dim) already folded into the Q projection weights at init.
        s = jnp.dot(q, k.T, preferred_element_type=jnp.float32) + mask
        s = s - jnp.max(s, axis=-1, keepdims=True)
        p = jnp.exp(s)
        p = p * pl.reciprocal(jnp.sum(p, axis=-1, keepdims=True), approx=True)
        ctx = jnp.dot(p.astype(jnp.bfloat16), v, preferred_element_type=jnp.float32)
        o_ref[0, :, lo:lo + head_dim] = ctx.astype(o_ref.dtype)
    # TODO(synk): for long sequences add flash-style KV blocking (online softmax)
    # and a batched per-group head dot to avoid the sub-128-lane per-head slices.


def pallas_attention(x, qkv_w_g, qkv_b_g, mask_add):
    """x: (B,S,H) f32; qkv_w_g: (G,H,3*gd) bf16; qkv_b_g: (G,1,3*gd) f32;
    mask_add: (B,1,S) f32 additive.  Returns bf16 (B,S,H) context."""
    B, S, H = x.shape
    G = qkv_w_g.shape[0]
    gd = qkv_w_g.shape[2] // 3
    hpg = gd // HEAD_DIM
    kern = functools.partial(_attn_kernel, heads_per_group=hpg,
                             head_dim=HEAD_DIM, group_dim=gd)
    return pl.pallas_call(
        kern,
        out_shape=jax.ShapeDtypeStruct((B, S, H), jnp.bfloat16),
        grid=(B, G),
        in_specs=[
            # invariant across the head-group axis -> fetched once per batch elem
            pl.BlockSpec((1, S, H), lambda b, g: (b, 0, 0)),
            pl.BlockSpec((1, H, 3 * gd), lambda b, g: (g, 0, 0)),
            pl.BlockSpec((1, 1, 3 * gd), lambda b, g: (g, 0, 0)),
            pl.BlockSpec((1, 1, S), lambda b, g: (b, 0, 0)),
        ],
        out_specs=pl.BlockSpec((1, S, gd), lambda b, g: (b, 0, g)),
        compiler_params=_cp(2),
    )(x, qkv_w_g, qkv_b_g, mask_add)


def _linear_res_ln_kernel(x_ref, w_ref, b_ref, r_ref, g_ref, beta_ref, o_ref):
    """LayerNorm((x @ w + b) + residual) * gamma + beta, fused epilogue."""
    y = jnp.dot(x_ref[...].astype(jnp.bfloat16), w_ref[...],
                preferred_element_type=jnp.float32) + b_ref[...]
    h = y + r_ref[...]
    mu = jnp.mean(h, axis=-1, keepdims=True)
    var = jnp.mean((h - mu) * (h - mu), axis=-1, keepdims=True)
    inv = lax.rsqrt(var + LN_EPS)
    o_ref[...] = ((h - mu) * inv * g_ref[...] + beta_ref[...]).astype(o_ref.dtype)


def pallas_linear_residual_ln(x, w, b, residual, gamma, beta):
    M, K = x.shape
    N = w.shape[1]
    tm = _row_tile(M)
    return pl.pallas_call(
        _linear_res_ln_kernel,
        out_shape=jax.ShapeDtypeStruct((M, N), jnp.float32),
        grid=(M // tm,),
        in_specs=[
            pl.BlockSpec((tm, K), lambda i: (i, 0)),
            _inv_spec((K, N)),
            _inv_spec((1, N)),
            pl.BlockSpec((tm, N), lambda i: (i, 0)),
            _inv_spec((1, N)),
            _inv_spec((1, N)),
        ],
        out_specs=pl.BlockSpec((tm, N), lambda i: (i, 0)),
        compiler_params=_cp(1),
    )(x, w, b.reshape(1, N), residual, gamma.reshape(1, N), beta.reshape(1, N))


def _ffn_ln_kernel(x_ref, wi_ref, bi_ref, wo_ref, bo_ref, g_ref, beta_ref, o_ref):
    """Whole FFN block: LN(gelu(x@Wi+bi)@Wo+bo + x) — intermediate stays in VMEM."""
    x = x_ref[...]                                           # f32, also the residual
    inter = jnp.dot(x.astype(jnp.bfloat16), wi_ref[...],
                    preferred_element_type=jnp.float32) + bi_ref[...]
    # TODO(synk): HF BERT uses exact erf-GELU; tanh approximation kept (erf has
    # no guaranteed Mosaic lowering) -> tiny numeric divergence vs PyTorch.
    inter = jax.nn.gelu(inter)
    y = jnp.dot(inter.astype(jnp.bfloat16), wo_ref[...],
                preferred_element_type=jnp.float32) + bo_ref[...]
    h = y + x
    mu = jnp.mean(h, axis=-1, keepdims=True)
    var = jnp.mean((h - mu) * (h - mu), axis=-1, keepdims=True)
    inv = lax.rsqrt(var + LN_EPS)
    o_ref[...] = ((h - mu) * inv * g_ref[...] + beta_ref[...]).astype(o_ref.dtype)


def pallas_ffn_ln(x, wi, bi, wo, bo, gamma, beta):
    M, H = x.shape
    I = wi.shape[1]
    tm = _row_tile(M)
    return pl.pallas_call(
        _ffn_ln_kernel,
        out_shape=jax.ShapeDtypeStruct((M, H), jnp.float32),
        grid=(M // tm,),
        in_specs=[
            pl.BlockSpec((tm, H), lambda i: (i, 0)),
            _inv_spec((H, I)),
            _inv_spec((1, I)),
            _inv_spec((I, H)),
            _inv_spec((1, H)),
            _inv_spec((1, H)),
            _inv_spec((1, H)),
        ],
        out_specs=pl.BlockSpec((tm, H), lambda i: (i, 0)),
        compiler_params=_cp(1),
    )(x, wi, bi.reshape(1, I), wo, bo.reshape(1, H),
      gamma.reshape(1, H), beta.reshape(1, H))


def _pool_cls_kernel(cls_ref, pw_ref, pb_ref, cw_ref, cb_ref, o_ref):
    """pooled = tanh(cls @ Wp + bp); logits = pooled @ Wc + bc (Wc lane-padded)."""
    pooled = jnp.tanh(
        jnp.dot(cls_ref[...].astype(jnp.bfloat16), pw_ref[...],
                preferred_element_type=jnp.float32) + pb_ref[...])
    logits = jnp.dot(pooled.astype(jnp.bfloat16), cw_ref[...],
                     preferred_element_type=jnp.float32) + cb_ref[...]
    o_ref[...] = logits.astype(o_ref.dtype)


def pallas_pool_classify(cls_tok, pw, pb, cw_pad, cb_pad):
    B, H = cls_tok.shape
    N = cw_pad.shape[1]      # lane-padded to 128
    return pl.pallas_call(
        _pool_cls_kernel,
        out_shape=jax.ShapeDtypeStruct((B, N), jnp.float32),
        grid=(1,),
        in_specs=[
            pl.BlockSpec((B, H), lambda i: (0, 0)),
            pl.BlockSpec((H, H), lambda i: (0, 0)),
            pl.BlockSpec((1, H), lambda i: (0, 0)),
            pl.BlockSpec((H, N), lambda i: (0, 0)),
            pl.BlockSpec((1, N), lambda i: (0, 0)),
        ],
        out_specs=pl.BlockSpec((B, N), lambda i: (0, 0)),
        compiler_params=_cp(1),
    )(cls_tok, pw, pb.reshape(1, H), cw_pad, cb_pad.reshape(1, N))


# --------------------------- parameter init --------------------------------


def init_params(key):
    def dense_f32(k, fan_in, fan_out):
        return 0.02 * jax.random.normal(k, (fan_in, fan_out), jnp.float32)

    keys = jax.random.split(key, 8 + NUM_LAYERS * 8)
    it = iter(keys)

    G = ATTN_HEAD_GROUPS
    hpg = NUM_HEADS // G
    gd = hpg * HEAD_DIM
    q_scale = 1.0 / math.sqrt(HEAD_DIM)

    p = {
        "word_emb": dense_f32(next(it), VOCAB, HIDDEN),
        "pos_emb": dense_f32(next(it), MAX_POS, HIDDEN),
        "type_emb": dense_f32(next(it), TYPE_VOCAB, HIDDEN),
        "emb_ln_g": jnp.ones((HIDDEN,), jnp.float32),
        "emb_ln_b": jnp.zeros((HIDDEN,), jnp.float32),
        "pooler_w": dense_f32(next(it), HIDDEN, HIDDEN).astype(jnp.bfloat16),
        "pooler_b": jnp.zeros((HIDDEN,), jnp.float32),
        "layers": [],
    }

    # classifier weights pre-padded to the 128-lane width (hoisted out of forward)
    cls_w = dense_f32(next(it), HIDDEN, NUM_LABELS)
    p["cls_w_pad"] = (jnp.zeros((HIDDEN, LANE), jnp.bfloat16)
                      .at[:, :NUM_LABELS].set(cls_w.astype(jnp.bfloat16)))
    p["cls_b_pad"] = jnp.zeros((LANE,), jnp.float32)   # bias=0; first NUM_LABELS used

    for _ in range(NUM_LAYERS):
        # fold 1/sqrt(head_dim) into the Q projection (its bias is zero here;
        # scale it too when loading a real checkpoint)
        wq = dense_f32(next(it), HIDDEN, HIDDEN) * q_scale
        wk = dense_f32(next(it), HIDDEN, HIDDEN)
        wv = dense_f32(next(it), HIDDEN, HIDDEN)
        # group into (G, H, 3*gd): group g's columns are [Q_g | K_g | V_g]
        qkv_w_g = jnp.stack([
            jnp.concatenate([wq[:, g * gd:(g + 1) * gd],
                             wk[:, g * gd:(g + 1) * gd],
                             wv[:, g * gd:(g + 1) * gd]], axis=1)
            for g in range(G)], axis=0).astype(jnp.bfloat16)
        qkv_b_g = jnp.zeros((G, 1, 3 * gd), jnp.float32)
        lp = {
            "qkv_w_g": qkv_w_g,
            "qkv_b_g": qkv_b_g,
            "ao_w": dense_f32(next(it), HIDDEN, HIDDEN).astype(jnp.bfloat16),
            "ao_b": jnp.zeros((HIDDEN,), jnp.float32),
            "ln1_g": jnp.ones((HIDDEN,), jnp.float32),
            "ln1_b": jnp.zeros((HIDDEN,), jnp.float32),
            "i_w": dense_f32(next(it), HIDDEN, INTERMEDIATE).astype(jnp.bfloat16),
            "i_b": jnp.zeros((INTERMEDIATE,), jnp.float32),
            "o_w": dense_f32(next(it), INTERMEDIATE, HIDDEN).astype(jnp.bfloat16),
            "o_b": jnp.zeros((HIDDEN,), jnp.float32),
            "ln2_g": jnp.ones((HIDDEN,), jnp.float32),
            "ln2_b": jnp.zeros((HIDDEN,), jnp.float32),
        }
        p["layers"].append(lp)
    return p


# ------------------------------ forward ------------------------------------


def bert_layer(x, mask_add, lp):
    B, S, H = x.shape
    x2 = x.reshape(B * S, H)

    # attention (QKV projection fused in-kernel; bf16 context out)
    ctx = pallas_attention(x, lp["qkv_w_g"], lp["qkv_b_g"], mask_add)   # (B,S,H) bf16

    # attention output projection + residual + LayerNorm1, fused
    h = pallas_linear_residual_ln(ctx.reshape(B * S, H), lp["ao_w"], lp["ao_b"],
                                  x2, lp["ln1_g"], lp["ln1_b"])

    # whole FFN + residual + LayerNorm2, fused
    h = pallas_ffn_ln(h, lp["i_w"], lp["i_b"], lp["o_w"], lp["o_b"],
                      lp["ln2_g"], lp["ln2_b"])
    return h.reshape(B, S, H)


def clinical_biobert_classifier_forward(params, input_ids, attention_mask=None,
                                        token_type_ids=None):
    """Equivalent of ClinicalBioBERTClassifier.forward(input_ids, attention_mask)
    with labels=None: returns logits of shape (B, NUM_LABELS)."""
    B, S = input_ids.shape
    if attention_mask is None:
        attention_mask = jnp.ones((B, S), jnp.int32)
    if token_type_ids is None:
        token_type_ids = jnp.zeros((B, S), jnp.int32)

    # --- embeddings: gathers are XLA glue; add + LayerNorm fused in one kernel ---
    word = jnp.take(params["word_emb"], input_ids, axis=0)           # (B,S,H)
    pos = params["pos_emb"][None, :S, :]                             # (1,S,H)
    tok = jnp.take(params["type_emb"], token_type_ids, axis=0)       # (B,S,H)
    x = pallas_emb_ln(word, pos, tok, params["emb_ln_g"], params["emb_ln_b"])

    # additive attention mask: 0 where attended, -1e9 where padded  (B,1,S)
    mask_add = (1.0 - attention_mask.astype(jnp.float32))[:, None, :] * MASK_NEG

    # --- encoder layers ---
    for lp in params["layers"]:
        x = bert_layer(x, mask_add, lp)

    # --- pooler (tanh on [CLS]) + classifier, fused; classifier lane-padded ---
    cls_tok = x[:, 0, :]                                             # (B,H)
    logits = pallas_pool_classify(cls_tok, params["pooler_w"], params["pooler_b"],
                                  params["cls_w_pad"], params["cls_b_pad"])
    return logits[:, :NUM_LABELS]


# ------------------------------- main ---------------------------------------

if __name__ == "__main__":
    key = jax.random.PRNGKey(0)
    k_param, k_ids = jax.random.split(key)

    params = init_params(k_param)

    B, S = 2, 8
    input_ids = jax.random.randint(k_ids, (B, S), 0, VOCAB, dtype=jnp.int32)
    attention_mask = jnp.array(
        [[1, 1, 1, 1, 1, 1, 1, 1],
         [1, 1, 1, 1, 1, 0, 0, 0]], dtype=jnp.int32)

    logits = clinical_biobert_classifier_forward(params, input_ids, attention_mask)
    logits = jax.block_until_ready(logits)

    assert logits.shape == (B, NUM_LABELS)
    assert bool(jnp.all(jnp.isfinite(logits)))
    print("KERNEL_OK")
</pallas_src>

<mosaic_0001>
module attributes {stable_mosaic.version = 11 : i64} {
  func.func @_emb_ln_kernel(%arg0: i32, %arg1: i32, %arg2: memref<1x8x32xf32, #tpu.memory_space<vmem>>, %arg3: memref<1x8x32xf32, #tpu.memory_space<vmem>>, %arg4: memref<1x8x32xf32, #tpu.memory_space<vmem>>, %arg5: memref<1x1x32xf32, #tpu.memory_space<vmem>>, %arg6: memref<1x1x32xf32, #tpu.memory_space<vmem>>, %arg7: memref<1x8x32xf32, #tpu.memory_space<vmem>>) attributes {dimension_semantics = [#tpu.dimension_semantics<parallel>, #tpu.dimension_semantics<parallel>], iteration_bounds = array<i64: 2, 1>, scalar_prefetch = 0 : i64, scratch_operands = 0 : i64, tpu.core_type = #tpu.core_type<tc>, window_params = [{transform_indices = @transform_0, window_bounds = array<i64: 1, 8, 32>}, {transform_indices = @transform_1, window_bounds = array<i64: 1, 8, 32>}, {transform_indices = @transform_2, window_bounds = array<i64: 1, 8, 32>}, {pipeline_mode = #tpu.pipeline_mode<synchronous>, transform_indices = @transform_3, window_bounds = array<i64: 1, 1, 32>}, {pipeline_mode = #tpu.pipeline_mode<synchronous>, transform_indices = @transform_4, window_bounds = array<i64: 1, 1, 32>}, {transform_indices = @transform_5, window_bounds = array<i64: 1, 8, 32>}]} {
    %c0 = arith.constant 0 : index
    %c0_0 = arith.constant 0 : index
    %c0_1 = arith.constant 0 : index
    %0 = vector.load %arg2[%c0, %c0_0, %c0_1] : memref<1x8x32xf32, #tpu.memory_space<vmem>>, vector<1x8x32xf32>
    %c0_2 = arith.constant 0 : index
    %c0_3 = arith.constant 0 : index
    %c0_4 = arith.constant 0 : index
    %1 = vector.load %arg3[%c0_2, %c0_3, %c0_4] : memref<1x8x32xf32, #tpu.memory_space<vmem>>, vector<1x8x32xf32>
    %2 = arith.addf %0, %1 : vector<1x8x32xf32>
    %c0_5 = arith.constant 0 : index
    %c0_6 = arith.constant 0 : index
    %c0_7 = arith.constant 0 : index
    %3 = vector.load %arg4[%c0_5, %c0_6, %c0_7] : memref<1x8x32xf32, #tpu.memory_space<vmem>>, vector<1x8x32xf32>
    %4 = arith.addf %2, %3 : vector<1x8x32xf32>
    %cst = arith.constant dense<0.000000e+00> : vector<1x8xf32>
    %5 = vector.multi_reduction <add>, %4, %cst [2] : vector<1x8x32xf32> to vector<1x8xf32>
    %6 = vector.shape_cast %5 : vector<1x8xf32> to vector<1x8x1xf32>
    %cst_8 = arith.constant 3.200000e+01 : f32
    %7 = vector.broadcast %cst_8 : f32 to vector<1x8x1xf32>
    %8 = arith.divf %6, %7 : vector<1x8x1xf32>
    %9 = vector.broadcast %8 : vector<1x8x1xf32> to vector<1x8x32xf32>
    %10 = arith.subf %4, %9 : vector<1x8x32xf32>
    %11 = vector.broadcast %8 : vector<1x8x1xf32> to vector<1x8x32xf32>
    %12 = arith.subf %4, %11 : vector<1x8x32xf32>
    %13 = arith.mulf %10, %12 : vector<1x8x32xf32>
    %cst_9 = arith.constant dense<0.000000e+00> : vector<1x8xf32>
    %14 = vector.multi_reduction <add>, %13, %cst_9 [2] : vector<1x8x32xf32> to vector<1x8xf32>
    %15 = vector.shape_cast %14 : vector<1x8xf32> to vector<1x8x1xf32>
    %cst_10 = arith.constant 3.200000e+01 : f32
    %16 = vector.broadcast %cst_10 : f32 to vector<1x8x1xf32>
    %17 = arith.divf %15, %16 : vector<1x8x1xf32>
    %cst_11 = arith.constant 9.99999996E-13 : f32
    %18 = vector.broadcast %cst_11 : f32 to vector<1x8x1xf32>
    %19 = arith.addf %17, %18 : vector<1x8x1xf32>
    %20 = math.rsqrt %19 : vector<1x8x1xf32>
    %21 = vector.broadcast %8 : vector<1x8x1xf32> to vector<1x8x32xf32>
    %22 = arith.subf %4, %21 : vector<1x8x32xf32>
    %23 = vector.broadcast %20 : vector<1x8x1xf32> to vector<1x8x32xf32>
    %24 = arith.mulf %22, %23 : vector<1x8x32xf32>
    %c0_12 = arith.constant 0 : index
    %c0_13 = arith.constant 0 : index
    %c0_14 = arith.constant 0 : index
    %25 = vector.load %arg5[%c0_12, %c0_13, %c0_14] : memref<1x1x32xf32, #tpu.memory_space<vmem>>, vector<1x1x32xf32>
    %26 = vector.broadcast %25 : vector<1x1x32xf32> to vector<1x8x32xf32>
    %27 = arith.mulf %24, %26 : vector<1x8x32xf32>
    %c0_15 = arith.constant 0 : index
    %c0_16 = arith.constant 0 : index
    %c0_17 = arith.constant 0 : index
    %28 = vector.load %arg6[%c0_15, %c0_16, %c0_17] : memref<1x1x32xf32, #tpu.memory_space<vmem>>, vector<1x1x32xf32>
    %29 = vector.broadcast %28 : vector<1x1x32xf32> to vector<1x8x32xf32>
    %30 = arith.addf %27, %29 : vector<1x8x32xf32>
    %c0_18 = arith.constant 0 : index
    %c0_19 = arith.constant 0 : index
    %c0_20 = arith.constant 0 : index
    %31 = vector.load %arg7[%c0_18, %c0_19, %c0_20] : memref<1x8x32xf32, #tpu.memory_space<vmem>>, vector<1x8x32xf32>
    tpu.vector_store %arg7[%c0_18, %c0_19, %c0_20], %30 {strides = array<i32>} : memref<1x8x32xf32, #tpu.memory_space<vmem>>, vector<1x8x32xf32>,
    return
  }
  func.func @transform_0(%arg0: i32, %arg1: i32) -> (i32, i32, i32) {
    %c0_i32 = arith.constant 0 : i32
    %c0_i32_0 = arith.constant 0 : i32
    return %arg0, %arg1, %c0_i32 : i32, i32, i32
  }
  func.func @transform_1(%arg0: i32, %arg1: i32) -> (i32, i32, i32) {
    %c0_i32 = arith.constant 0 : i32
    %c0_i32_0 = arith.constant 0 : i32
    %c0_i32_1 = arith.constant 0 : i32
    return %c0_i32, %arg1, %c0_i32_0 : i32, i32, i32
  }
  func.func @transform_2(%arg0: i32, %arg1: i32) -> (i32, i32, i32) {
    %c0_i32 = arith.constant 0 : i32
    %c0_i32_0 = arith.constant 0 : i32
    return %arg0, %arg1, %c0_i32 : i32, i32, i32
  }
  func.func @transform_3(%arg0: i32, %arg1: i32) -> (i32, i32, i32) {
    %c0_i32 = arith.constant 0 : i32
    %c0_i32_0 = arith.constant 0 : i32
    %c0_i32_1 = arith.constant 0 : i32
    %c0_i32_2 = arith.constant 0 : i32
    return %c0_i32, %c0_i32_0, %c0_i32_1 : i32, i32, i32
  }
  func.func @transform_4(%arg0: i32, %arg1: i32) -> (i32, i32, i32) {
    %c0_i32 = arith.constant 0 : i32
    %c0_i32_0 = arith.constant 0 : i32
    %c0_i32_1 = arith.constant 0 : i32
    %c0_i32_2 = arith.constant 0 : i32
    return %c0_i32, %c0_i32_0, %c0_i32_1 : i32, i32, i32
  }
  func.func @transform_5(%arg0: i32, %arg1: i32) -> (i32, i32, i32) {
    %c0_i32 = arith.constant 0 : i32
    %c0_i32_0 = arith.constant 0 : i32
    return %arg0, %arg1, %c0_i32 : i32, i32, i32
  }
}

</mosaic_0001>

<llo_original>
// kernel: tpu_custom_call.1
$region0: #{tpu_custom_call.1}
  #allocation0 [shape = 'u32[]', space=smem, size = 0x4, offset = 0x4, fixed_abs, tag = 'smem constant byte address 0x4 - core index']
  #allocation1 [shape = 'u32[144,128]{1,0:T(1,128)}', space=vmem, size = 0x12000, scoped, tag = 'internal scratch']
  %s0 = inlined_call_operand.hbm [shape: f32[2,8,32], index: 0, kind: input, shape index: {}]
  %s1 = inlined_call_operand.hbm [shape: f32[1,8,32], index: 1, kind: input, shape index: {}]
  %s2 = inlined_call_operand.hbm [shape: f32[2,8,32], index: 2, kind: input, shape index: {}]
  %s3 = inlined_call_operand.vmem [shape: f32[1,1,32], index: 3, kind: input, shape index: {}]
  %s4 = inlined_call_operand.vmem [shape: f32[1,1,32], index: 4, kind: input, shape index: {}]
  %s5 = inlined_call_operand.hbm [shape: f32[2,8,32], index: 5, kind: output, shape index: {}]
  %s6 = sld [smem:[#allocation0]]
  $region65: #{tpu_custom_call.1} parent=0
    _
  %s8 = ssub.s32 1, %s6
  %s9 = scalar_select 0, %s8, %s6
  $region1: #{tpu_custom_call.1} parent=0
    #allocation2 [shape = 'u8[8192]{0}', space=vmem, size = 0x2000, scoped, tag = 'input window, operand 0']
    #allocation3 [shape = 's32[2]{0}', space=sflag, size = 0x8, scoped, tag = 'scoped memory for tpu_custom_call.1']
    #allocation4 [shape = 's32[2]{0}', space=sflag, size = 0x8, scoped, tag = 'scoped memory for tpu_custom_call.1']
    #allocation5 [shape = 'u8[4096]{0}', space=vmem, size = 0x1000, scoped, tag = 'input window, operand 1, single buffered']
    #allocation6 [shape = 's32[1]{0}', space=sflag, size = 0x4, scoped, tag = 'scoped memory for tpu_custom_call.1']
    #allocation7 [shape = 'u8[8192]{0}', space=vmem, size = 0x2000, scoped, tag = 'input window, operand 2']
    #allocation8 [shape = 'u8[8192]{0}', space=vmem, size = 0x2000, scoped, tag = 'output window, operand 0']
    %10 = vsyncpa [#allocation3], 0
    %s11 = scalar_lea.sflag [#allocation3], 1
    %12 = vsyncpa %s11, 0
    %13 = vsyncpa [#allocation6], 0
    %14 = vsyncpa [#allocation4], 0
    %s15 = scalar_lea.sflag [#allocation4], 1
    %16 = vsyncpa %s15, 0
    loop: start=0, step=1, limit=4
    $region2: #{tpu_custom_call.1} parent=1 // loop_pre_header
      _
    $region3: #{tpu_custom_call.1} parent=1 // loop_header
      %s18 = sphi 0, %s22
      %p19 = scmp.ge.s32.totalorder %s18, 4
      %s25 = sphi 0, %s37
      %s26 = sphi 0, %s33
      %s27 = sphi 0, %s25
      %s28 = sphi 0, %s26
      %s29 = sphi 0, %s27
      %s30 = sphi 0, %s28
      %s42 = sphi 0, %s44
      %s45 = sphi 0, %s42
      %s46 = sphi 0, %s45
      %s62 = sphi 0, %s46
      %s68 = sphi 0, %s70
      %s71 = sphi 0, %s68
      %s72 = sphi 0, %s71
      %s88 = sphi 0, %s72
      %s96 = sphi 0, %s98
      %s99 = sphi 0, %s96
      %s100 = sphi 0, %s99
      %s116 = sphi 0, %s100
      %s120 = sphi 0, %s120
      %s122 = sphi 0, %s120
      %s123 = sphi 0, %s122
      %s137 = sphi 0, %s123
      %s141 = sphi 0, %s141
      %s143 = sphi 0, %s141
      %s144 = sphi 0, %s143
      %s158 = sphi 0, %s144
      %s166 = sphi 0, %s168
      %s169 = sphi 0, %s166
      %s170 = sphi 0, %s169
      %s186 = sphi 0, %s170
    $region4: #{tpu_custom_call.1} parent=1 // loop_header_branch
      %21 = sbr.rel (%p19) target = $region8
    $region5: #{tpu_custom_call.1} parent=1 // loop_body
      %s23 = ssub.s32 %s18, 1
      %s24 = ssub.s32 %s18, 2
      %s31 = sadd.s32 1, %s26
      %p32 = scmp.ge.s32.totalorder %s31, 1
      %s33 = scalar_select %p32, 0, %s31
      %s34 = sadd.s32 1, %s25
      %s35 = scalar_select %p32, %s34, %s25
      %p36 = scmp.ge.s32.totalorder %s35, 2
      %s37 = scalar_select %p36, 0, %s35
      %s38 = ssub.s32 %s25, %s37
      %s39 = ssub.s32 %s26, %s33
      %s40 = sor.u32 %s38, %s39
      %p41 = scmp.eq.s32.totalorder %s40, 0
      %s43 = sadd.s32 %s42, 1
      %s44 = scalar_select %p41, %s42, %s43
      %p47 = pneg %p41
      %p48 = scmp.eq.s32.totalorder %s18, 1
      %p49 = por %p47, %p48
      %p50 = scmp.ne.s32.totalorder %s42, %s45
      %p51 = scmp.eq.s32.totalorder %s18, 0
      %p52 = por %p50, %p51
      %p53 = scmp.ne.s32.totalorder %s42, %s45
      %p54 = scmp.eq.s32.totalorder %s23, 1
      %p55 = por %p53, %p54
      %p56 = scmp.ne.s32.totalorder %s45, %s46
      %p57 = scmp.eq.s32.totalorder %s23, 0
      %p58 = por %p56, %p57
      %p59 = scmp.ne.s32.totalorder %s45, %s46
      %p60 = scmp.eq.s32.totalorder %s24, 1
      %p61 = por %p59, %p60
      %p63 = scmp.ne.s32.totalorder %s46, %s62
      %p64 = scmp.eq.s32.totalorder %s24, 0
      %p65 = por %p63, %p64
      %s66 = ssub.s32 %s26, %s33
      %p67 = scmp.eq.s32.totalorder %s66, 0
      %s69 = sadd.s32 %s68, 1
      %s70 = scalar_select %p67, %s68, %s69
      %p73 = pneg %p67
      %p74 = scmp.eq.s32.totalorder %s18, 1
      %p75 = por %p73, %p74
      %p76 = scmp.ne.s32.totalorder %s68, %s71
      %p77 = scmp.eq.s32.totalorder %s18, 0
      %p78 = por %p76, %p77
      %p79 = scmp.ne.s32.totalorder %s68, %s71
      %p80 = scmp.eq.s32.totalorder %s23, 1
      %p81 = por %p79, %p80
      %p82 = scmp.ne.s32.totalorder %s71, %s72
      %p83 = scmp.eq.s32.totalorder %s23, 0
      %p84 = por %p82, %p83
      %p85 = scmp.ne.s32.totalorder %s71, %s72
      %p86 = scmp.eq.s32.totalorder %s24, 1
      %p87 = por %p85, %p86
      %p89 = scmp.ne.s32.totalorder %s72, %s88
      %p90 = scmp.eq.s32.totalorder %s24, 0
      %p91 = por %p89, %p90
      %s92 = ssub.s32 %s25, %s37
      %s93 = ssub.s32 %s26, %s33
      %s94 = sor.u32 %s92, %s93
      %p95 = scmp.eq.s32.totalorder %s94, 0
      %s97 = sadd.s32 %s96, 1
      %s98 = scalar_select %p95, %s96, %s97
      %p101 = pneg %p95
      %p102 = scmp.eq.s32.totalorder %s18, 1
      %p103 = por %p101, %p102
      %p104 = scmp.ne.s32.totalorder %s96, %s99
      %p105 = scmp.eq.s32.totalorder %s18, 0
      %p106 = por %p104, %p105
      %p107 = scmp.ne.s32.totalorder %s96, %s99
      %p108 = scmp.eq.s32.totalorder %s23, 1
      %p109 = por %p107, %p108
      %p110 = scmp.ne.s32.totalorder %s99, %s100
      %p111 = scmp.eq.s32.totalorder %s23, 0
      %p112 = por %p110, %p111
      %p113 = scmp.ne.s32.totalorder %s99, %s100
      %p114 = scmp.eq.s32.totalorder %s24, 1
      %p115 = por %p113, %p114
      %p117 = scmp.ne.s32.totalorder %s100, %s116
      %p118 = scmp.eq.s32.totalorder %s24, 0
      %p119 = por %p117, %p118
      %s121 = sadd.s32 %s120, 1
      %p124 = scmp.eq.s32.totalorder %s18, 1
      %p125 = scmp.ne.s32.totalorder %s120, %s122
      %p126 = scmp.eq.s32.totalorder %s18, 0
      %p127 = por %p125, %p126
      %p128 = scmp.ne.s32.totalorder %s120, %s122
      %p129 = scmp.eq.s32.totalorder %s23, 1
      %p130 = por %p128, %p129
      %p131 = scmp.ne.s32.totalorder %s122, %s123
      %p132 = scmp.eq.s32.totalorder %s23, 0
      %p133 = por %p131, %p132
      %p134 = scmp.ne.s32.totalorder %s122, %s123
      %p135 = scmp.eq.s32.totalorder %s24, 1
      %p136 = por %p134, %p135
      %p138 = scmp.ne.s32.totalorder %s123, %s137
      %p139 = scmp.eq.s32.totalorder %s24, 0
      %p140 = por %p138, %p139
      %s142 = sadd.s32 %s141, 1
      %p145 = scmp.eq.s32.totalorder %s18, 1
      %p146 = scmp.ne.s32.totalorder %s141, %s143
      %p147 = scmp.eq.s32.totalorder %s18, 0
      %p148 = por %p146, %p147
      %p149 = scmp.ne.s32.totalorder %s141, %s143
      %p150 = scmp.eq.s32.totalorder %s23, 1
      %p151 = por %p149, %p150
      %p152 = scmp.ne.s32.totalorder %s143, %s144
      %p153 = scmp.eq.s32.totalorder %s23, 0
      %p154 = por %p152, %p153
      %p155 = scmp.ne.s32.totalorder %s143, %s144
      %p156 = scmp.eq.s32.totalorder %s24, 1
      %p157 = por %p155, %p156
      %p159 = scmp.ne.s32.totalorder %s144, %s158
      %p160 = scmp.eq.s32.totalorder %s24, 0
      %p161 = por %p159, %p160
      %s162 = ssub.s32 %s25, %s37
      %s163 = ssub.s32 %s26, %s33
      %s164 = sor.u32 %s162, %s163
      %p165 = scmp.eq.s32.totalorder %s164, 0
      %s167 = sadd.s32 %s166, 1
      %s168 = scalar_select %p165, %s166, %s167
      %p171 = pneg %p165
      %p172 = scmp.eq.s32.totalorder %s18, 1
      %p173 = por %p171, %p172
      %p174 = scmp.ne.s32.totalorder %s166, %s169
      %p175 = scmp.eq.s32.totalorder %s18, 0
      %p176 = por %p174, %p175
      %p177 = scmp.ne.s32.totalorder %s166, %s169
      %p178 = scmp.eq.s32.totalorder %s23, 1
      %p179 = por %p177, %p178
      %p180 = scmp.ne.s32.totalorder %s169, %s170
      %p181 = scmp.eq.s32.totalorder %s23, 0
      %p182 = por %p180, %p181
      %p183 = scmp.ne.s32.totalorder %s169, %s170
      %p184 = scmp.eq.s32.totalorder %s24, 1
      %p185 = por %p183, %p184
      %p187 = scmp.ne.s32.totalorder %s170, %s186
      %p188 = scmp.eq.s32.totalorder %s24, 0
      %p189 = por %p187, %p188
      %p190 = scmp.le.s32.totalorder 1, %s18
      %p191 = scmp.lt.s32.totalorder %s18, 3
      %p192 = pnand %p190, %p191
      %p193 = pneg %p192
      // Predicated region
      $region9: #{tpu_custom_call.1} parent=5 // pred_check
        _
      $region10: #{tpu_custom_call.1} parent=5 // pred_check_branch
        %195 = sbr.rel (%p192) target = $region12
      $region11: #{tpu_custom_call.1} parent=5 // pred_region
        %s196 = ssub.s32 %s18, 1
        // Predicated region
        $region13: #{tpu_custom_call.1} parent=11 // pred_check
          %p197 = pneg %p84
        $region14: #{tpu_custom_call.1} parent=11 // pred_check_branch
          %199 = sbr.rel (%p197) target = $region16
        $region15: #{tpu_custom_call.1} parent=11 // pred_region
          %s201 = ssub.s32 128, 128
          %202 = vsyncadd [#allocation6], %s201
          %s203 = smul.addr %s28, 128
          %s204 = scalar_lea.hbm %s1, %s203
          %s206 = sshll.u32 [#allocation5], 4
          %s207 = int_to_ptr.vmem [resolvable:$true] %s206
          %209 = dma.hbm_to_vmem [thread:$0]  %s204, 128, %s207, [#allocation6]
        $region16: #{tpu_custom_call.1} parent=11 // pred_fallthru
          _
        // Predicated region
        $region17: #{tpu_custom_call.1} parent=11 // pred_check
          %p210 = pneg %p133
        $region18: #{tpu_custom_call.1} parent=11 // pred_check_branch
          %212 = sbr.rel (%p210) target = $region20
        $region19: #{tpu_custom_call.1} parent=11 // pred_region
          _
        $region20: #{tpu_custom_call.1} parent=11 // pred_fallthru
          _
        // Predicated region
        $region21: #{tpu_custom_call.1} parent=11 // pred_check
          %p213 = pneg %p154
        $region22: #{tpu_custom_call.1} parent=11 // pred_check_branch
          %215 = sbr.rel (%p213) target = $region24
        $region23: #{tpu_custom_call.1} parent=11 // pred_region
          _
        $region24: #{tpu_custom_call.1} parent=11 // pred_fallthru
          _
      $region12: #{tpu_custom_call.1} parent=5 // pred_fallthru
        _
      %p216 = scmp.lt.s32.totalorder %s18, 2
      // Predicated region
      $region25: #{tpu_custom_call.1} parent=5 // pred_check
        %p217 = pneg %p216
      $region26: #{tpu_custom_call.1} parent=5 // pred_check_branch
        %219 = sbr.rel (%p217) target = $region28
      $region27: #{tpu_custom_call.1} parent=5 // pred_region
        // Predicated region
        $region29: #{tpu_custom_call.1} parent=27 // pred_check
          %p220 = pneg %p52
        $region30: #{tpu_custom_call.1} parent=27 // pred_check_branch
          %222 = sbr.rel (%p220) target = $region32
        $region31: #{tpu_custom_call.1} parent=27 // pred_region
          %s223 = sand.u32 %s18, 1
          %s224 = scalar_lea.sflag [#allocation3], %s223
          %s225 = sand.u32 %s42, 1
          %s226 = smul.addr %s225, 8
          %s227 = scalar_lea.vmem [#allocation2], %s226
          %s229 = ssub.s32 128, 128
          %230 = vsyncadd %s224, %s229
          %s231 = sadd.s32 %s26, %s25
          %s232 = smul.addr %s231, 128
          %s233 = scalar_lea.hbm %s0, %s232
          %s235 = sshll.u32 %s227, 4
          %s236 = int_to_ptr.vmem [resolvable:$true] %s235
          %238 = dma.hbm_to_vmem [thread:$0]  %s233, 128, %s236, %s224
        $region32: #{tpu_custom_call.1} parent=27 // pred_fallthru
          _
        // Predicated region
        $region33: #{tpu_custom_call.1} parent=27 // pred_check
          %p239 = pneg %p106
        $region34: #{tpu_custom_call.1} parent=27 // pred_check_branch
          %241 = sbr.rel (%p239) target = $region36
        $region35: #{tpu_custom_call.1} parent=27 // pred_region
          %s242 = sand.u32 %s18, 1
          %s243 = scalar_lea.sflag [#allocation3], %s242
          %s244 = sand.u32 %s96, 1
          %s245 = smul.addr %s244, 8
          %s246 = scalar_lea.vmem [#allocation7], %s245
          %s248 = ssub.s32 128, 128
          %249 = vsyncadd %s243, %s248
          %s250 = sadd.s32 %s26, %s25
          %s251 = smul.addr %s250, 128
          %s252 = scalar_lea.hbm %s2, %s251
          %s254 = sshll.u32 %s246, 4
          %s255 = int_to_ptr.vmem [resolvable:$true] %s254
          %257 = dma.hbm_to_vmem [thread:$0]  %s252, 128, %s255, %s243
        $region36: #{tpu_custom_call.1} parent=27 // pred_fallthru
          _
      $region28: #{tpu_custom_call.1} parent=5 // pred_fallthru
        _
      %p258 = scmp.le.s32.totalorder 1, %s18
      %p259 = scmp.lt.s32.totalorder %s18, 3
      %p260 = pnand %p258, %p259
      %p261 = pneg %p260
      // Predicated region
      $region37: #{tpu_custom_call.1} parent=5 // pred_check
        _
      $region38: #{tpu_custom_call.1} parent=5 // pred_check_branch
        %263 = sbr.rel (%p260) target = $region40
      $region39: #{tpu_custom_call.1} parent=5 // pred_region
        %s264 = ssub.s32 %s18, 1
        %s265 = sand.u32 %s23, 1
        %s266 = scalar_lea.sflag [#allocation3], %s265
        %s267 = sand.u32 %s45, 1
        %s268 = smul.addr %s267, 8
        %s269 = scalar_lea.vmem [#allocation2], %s268
        // Predicated region
        $region41: #{tpu_custom_call.1} parent=39 // pred_check
          %p270 = pneg %p58
        $region42: #{tpu_custom_call.1} parent=39 // pred_check_branch
          %272 = sbr.rel (%p270) target = $region44
        $region43: #{tpu_custom_call.1} parent=39 // pred_region
          %273 = dma.done %s266, 128
        $region44: #{tpu_custom_call.1} parent=39 // pred_fallthru
          _
        // Predicated region
        $region45: #{tpu_custom_call.1} parent=39 // pred_check
          %p274 = pneg %p84
        $region46: #{tpu_custom_call.1} parent=39 // pred_check_branch
          %276 = sbr.rel (%p274) target = $region48
        $region47: #{tpu_custom_call.1} parent=39 // pred_region
          %277 = dma.done [#allocation6], 128
        $region48: #{tpu_custom_call.1} parent=39 // pred_fallthru
          _
        %s278 = sand.u32 %s23, 1
        %s279 = scalar_lea.sflag [#allocation3], %s278
        %s280 = sand.u32 %s99, 1
        %s281 = smul.addr %s280, 8
        %s282 = scalar_lea.vmem [#allocation7], %s281
        // Predicated region
        $region49: #{tpu_custom_call.1} parent=39 // pred_check
          %p283 = pneg %p112
        $region50: #{tpu_custom_call.1} parent=39 // pred_check_branch
          %285 = sbr.rel (%p283) target = $region52
        $region51: #{tpu_custom_call.1} parent=39 // pred_region
          %286 = dma.done %s279, 128
        $region52: #{tpu_custom_call.1} parent=39 // pred_fallthru
          _
        %s287 = sand.u32 %s23, 1
        %s288 = scalar_lea.sflag [#allocation3], %s287
        %s289 = sand.u32 %s45, 1
        %s290 = smul.addr %s289, 8
        %s291 = scalar_lea.vmem [#allocation2], %s290
        %p292 = pneg %p58
        %p293 = pneg %p55
        %p294 = pneg %p84
        %p295 = pneg %p81
        %s296 = sand.u32 %s23, 1
        %s297 = scalar_lea.sflag [#allocation3], %s296
        %s298 = sand.u32 %s99, 1
        %s299 = smul.addr %s298, 8
        %s300 = scalar_lea.vmem [#allocation7], %s299
        %p301 = pneg %p112
        %p302 = pneg %p109
        %p303 = pneg %p133
        %p304 = pneg %p130
        %p305 = pneg %p154
        %p306 = pneg %p151
        %p307 = pneg %p182
        %p308 = pneg %p179
        %s309 = sand.u32 %s169, 1
        %s310 = scalar_lea.sflag [#allocation4], %s309
        %s311 = sand.u32 %s169, 1
        %s312 = smul.addr %s311, 8
        %s313 = scalar_lea.vmem [#allocation8], %s312
        %v314 = vld [vmem:[%s269] sm:$0xff]
        %v315 = vld [vmem:[#allocation5] sm:$0xff]
        %v316 = vadd.f32 %v314, %v315
        %v317 = vld [vmem:[%s282] sm:$0xff]
        %v318 = vadd.f32 %v316, %v317
        %vm319 = vcmask 261120
        %v320 = vsel %vm319, %v318, 0.0
        %321 = vadd.xlane.f32.xlu0 %v320
        %v322 = vpop.xlane.xlu0 %321
        %v323 = vrcp.pop 32.0
        %v324 = vmul.f32 %v322, %v323
        %v325 = vsub.f32 %v318, %v324
        %v326 = vmul.f32 %v325, %v325
        %v327 = vsel %vm319, %v326, 0.0
        %328 = vadd.xlane.f32.xlu0 %v327
        %v329 = vpop.xlane.xlu0 %328
        %v330 = vmul.f32 %v329, %v323
        %v331 = vadd.f32 %v330, 1e-12
        %v332 = vrsqrt.pop %v331
        %v333 = vmul.f32 %v325, %v332
        %v334 = vld [vmem:[%s3] sm:$0x1]
        %v336 = vlaneseq
        %v337 = vshrl.u32 %v336, 7
        %v338 = vsub.s32 0, %v337
        %v339 = vrot.slane %v334, %v338
        %v341 = vmul.f32 %v333, %v339
        %v342 = vld [vmem:[%s4] sm:$0x1]
        %v344 = vlaneseq
        %v345 = vshrl.u32 %v344, 7
        %v346 = vsub.s32 0, %v345
        %v347 = vrot.slane %v342, %v346
        %v349 = vadd.f32 %v341, %v347
        %350 = vst.msk [vmem:[%s313] sm:$0xff] %vm319, %v349
        %s351 = sand.u32 %s169, 1
        %s352 = scalar_lea.sflag [#allocation4], %s351
        %s353 = sand.u32 %s169, 1
        %s354 = smul.addr %s353, 8
        %s355 = scalar_lea.vmem [#allocation8], %s354
        // Predicated region
        $region53: #{tpu_custom_call.1} parent=39 // pred_check
          %p356 = pneg %p179
        $region54: #{tpu_custom_call.1} parent=39 // pred_check_branch
          %358 = sbr.rel (%p356) target = $region56
        $region55: #{tpu_custom_call.1} parent=39 // pred_region
          %s360 = ssub.s32 128, 128
          %361 = vsyncadd %s352, %s360
          %s362 = sadd.s32 %s28, %s27
          %s363 = smul.addr %s362, 128
          %s364 = scalar_lea.hbm %s5, %s363
          %s366 = sshll.u32 %s355, 4
          %s367 = int_to_ptr.vmem [resolvable:$true] %s366
          %369 = dma.vmem_to_hbm [thread:$0]  %s367, 128, %s364, %s352
        $region56: #{tpu_custom_call.1} parent=39 // pred_fallthru
          _
      $region40: #{tpu_custom_call.1} parent=5 // pred_fallthru
        _
      %p370 = scmp.le.s32.totalorder 2, %s18
      // Predicated region
      $region57: #{tpu_custom_call.1} parent=5 // pred_check
        %p371 = pneg %p370
      $region58: #{tpu_custom_call.1} parent=5 // pred_check_branch
        %373 = sbr.rel (%p371) target = $region60
      $region59: #{tpu_custom_call.1} parent=5 // pred_region
        %s374 = ssub.s32 %s18, 2
        // Predicated region
        $region61: #{tpu_custom_call.1} parent=59 // pred_check
          %p375 = pneg %p185
        $region62: #{tpu_custom_call.1} parent=59 // pred_check_branch
          %377 = sbr.rel (%p375) target = $region64
        $region63: #{tpu_custom_call.1} parent=59 // pred_region
          %s378 = sand.u32 %s170, 1
          %s379 = scalar_lea.sflag [#allocation4], %s378
          %s380 = sand.u32 %s170, 1
          %s381 = smul.addr %s380, 8
          %s382 = scalar_lea.vmem [#allocation8], %s381
          %383 = dma.done %s379, 128
        $region64: #{tpu_custom_call.1} parent=59 // pred_fallthru
          _
      $region60: #{tpu_custom_call.1} parent=5 // pred_fallthru
        _
    $region6: #{tpu_custom_call.1} parent=1 // loop_footer
      %s22 = sadd.s32 1, %s18
    $region7: #{tpu_custom_call.1} parent=1 // loop_footer_branch
      %17 = sbr.rel target = $region3
    $region8: #{tpu_custom_call.1} parent=1 // loop_exit
      _
    %384 = vsyncpa [#allocation3], 1
    %s385 = scalar_lea.sflag [#allocation3], 1
    %386 = vsyncpa %s385, 1
    %387 = vsyncpa [#allocation6], 1
    %388 = vsyncpa [#allocation4], 1
    %s389 = scalar_lea.sflag [#allocation4], 1
    %390 = vsyncpa %s389, 1

</llo_original>
